<compile_context>
chip_gen: v6e
topology: v6e:2x2x1
jax: 0.10.0
libtpu: 0.0.40
codegen_flags: <defaults>
</compile_context>

<pallas_src>
import jax
import jax.numpy as jnp
from jax.experimental import pallas as pl
from jax.experimental.pallas import tpu as pltpu


def _mlp_pe_kernel(c_ref, w1_ref, b1_ref, w2_ref, b2_ref, o_ref):
    # c_ref : (T, 3*pack)       packed coords (pack voxels per row)
    # w1_ref: (3*pack, H*pack)  block-diagonal layer-1 weights
    # b1_ref: (1, H*pack)
    # w2_ref: (H*pack, D*pack)  block-diagonal layer-2 weights
    # b2_ref: (1, D*pack)
    # o_ref : (T, D*pack)       D*pack == 128 -> unmasked, lane-dense stores
    c = c_ref[...]
    # Layer 1 on the MXU.  The MXU has ~100% slack in this kernel; the previous
    # VPU broadcast-FMA chain made VALU/XLU the saturating slots.
    h = jnp.dot(c, w1_ref[...], preferred_element_type=jnp.float32) + b1_ref[...]
    h = jnp.maximum(h, 0.0)                          # ReLU
    # Layer 2 on the MXU.
    out = jnp.dot(h, w2_ref[...], preferred_element_type=jnp.float32) + b2_ref[...]
    o_ref[...] = out.astype(o_ref.dtype)


def _choose_pack(d_model):
    # Fuse `pack` voxels per packed row so each output row is 128 lanes wide.
    if d_model <= 128 and 128 % d_model == 0:
        return 128 // d_model
    return 1  # correct but masked stores if d_model doesn't divide 128


def pack_mlp_params(w1, b1, w2, b2, pack):
    """Build block-diagonal packed weights once (hoist out of the per-call path)."""
    eye = jnp.eye(pack, dtype=w1.dtype)
    w1_p = jnp.kron(eye, w1)                          # (3*pack, H*pack)
    w2_p = jnp.kron(eye, w2)                          # (H*pack, D*pack)
    b1_p = jnp.tile(b1, pack).reshape(1, -1)          # (1, H*pack)
    b2_p = jnp.tile(b2, pack).reshape(1, -1)          # (1, D*pack)
    return w1_p, b1_p, w2_p, b2_p


# VMEM cap on packed tile rows.  Double-buffered coords (lane-padded to 128) + output
# at t_pack=8192 and f32 output is ~16-18 MiB -> fits every generation's scoped VMEM
# once vmem_limit_bytes is set explicitly (v5e default 16 MiB, v7x physical 64 MiB).
_T_PACK_MAX = 8192


def _choose_tile(n_pack, t_req):
    """Largest multiple of 8 dividing n_pack, <= min(t_req, _T_PACK_MAX), preferring an
    even grid-step count (dual-TensorCore balance on v7x)."""
    t_max = max(8, min(t_req, _T_PACK_MAX, n_pack))
    t_max = (t_max // 8) * 8
    best_div = None
    best_even = None
    for t in range(t_max, 7, -8):
        if n_pack % t:
            continue
        if best_div is None:
            best_div = t
        if (n_pack // t) % 2 == 0:
            best_even = t
            break
    if best_div is None:
        best_div = 8
    if best_even is not None and best_even * 2 >= best_div:
        return best_even
    return best_div


def dynamic_learnable_positional_encoding(voxel_coords, w1, b1, w2, b2, *,
                                          tile_n=32768, out_dtype=jnp.bfloat16,
                                          packed_params=None):
    """voxel_coords: (N, 3) f32. w1: (3, H), b1: (H,), w2: (H, D), b2: (D,).
    Returns (N, D) positional encodings (out_dtype; pass jnp.float32 to match PyTorch)."""
    n, in_dim = voxel_coords.shape
    assert in_dim == 3
    hidden = w1.shape[1]
    d_model = w2.shape[1]
    assert w1.shape == (3, hidden) and b1.shape == (hidden,)
    assert w2.shape == (hidden, d_model) and b2.shape == (d_model,)

    pack = _choose_pack(d_model)
    hp = hidden * pack
    dp = d_model * pack

    # Pad N to a multiple of pack * 8 (sublane constraint on the packed layout).
    mult = pack * 8
    n_padded = ((n + mult - 1) // mult) * mult
    if n_padded != n:
        voxel_coords = jnp.pad(voxel_coords, ((0, n_padded - n), (0, 0)))
    n_pack = n_padded // pack

    t_pack = _choose_tile(n_pack, max(tile_n // pack, 8))
    grid = (n_pack // t_pack,)

    # Packed operands (build once per call unless supplied pre-packed).
    if packed_params is None:
        packed_params = pack_mlp_params(w1, b1, w2, b2, pack)
    w1_p, b1_p, w2_p, b2_p = packed_params
    coords_p = voxel_coords.reshape(n_pack, 3 * pack)

    # Explicit VMEM budget: coords block is lane-padded to 128 in VMEM, output block is
    # max(dp,128) lanes; both are double-buffered.  Weights are tiny but double-buffered too.
    out_itemsize = jnp.dtype(out_dtype).itemsize
    coords_buf = t_pack * 128 * 4
    out_buf = t_pack * max(dp, 128) * out_itemsize
    w_bytes = (3 * pack * hp + hp * dp + hp + dp) * 4
    vmem_need = 2 * (coords_buf + out_buf) + 2 * w_bytes + (4 << 20)
    vmem_limit = int(min(max(vmem_need, 16 << 20), 48 << 20))

    out_p = pl.pallas_call(
        _mlp_pe_kernel,
        out_shape=jax.ShapeDtypeStruct((n_pack, dp), out_dtype),
        grid_spec=pltpu.PrefetchScalarGridSpec(
            num_scalar_prefetch=0,
            grid=grid,
            in_specs=[
                pl.BlockSpec((t_pack, 3 * pack), lambda i: (i, 0)),  # packed coords tile
                pl.BlockSpec((3 * pack, hp), lambda i: (0, 0)),      # W1 (whole)
                pl.BlockSpec((1, hp), lambda i: (0, 0)),             # b1
                pl.BlockSpec((hp, dp), lambda i: (0, 0)),            # W2 (whole)
                pl.BlockSpec((1, dp), lambda i: (0, 0)),             # b2
            ],
            out_specs=pl.BlockSpec((t_pack, dp), lambda i: (i, 0)),
        ),
        compiler_params=pltpu.CompilerParams(
            dimension_semantics=("parallel",),
            vmem_limit_bytes=vmem_limit),
    )(coords_p, w1_p, b1_p, w2_p, b2_p)

    # Free row-major view back to (n_padded, d_model), then drop the padding rows.
    out = out_p.reshape(n_padded, d_model)
    return out[:n]


def _reference(voxel_coords, w1, b1, w2, b2):
    h = jnp.maximum(voxel_coords @ w1 + b1, 0.0)
    return h @ w2 + b2


if __name__ == "__main__":
    key = jax.random.PRNGKey(0)
    k_coords, k_w1, k_b1, k_w2, k_b2 = jax.random.split(key, 5)

    d_model = 32
    hidden = d_model // 2   # 16
    n_voxels = 1000         # deliberately NOT a multiple of pack*8 to exercise padding

    # Parameters stored as (in, out), matching nn.Linear(3,16)/nn.Linear(16,32) transposed.
    w1 = jax.random.normal(k_w1, (3, hidden), dtype=jnp.float32) * 0.1
    b1 = jax.random.normal(k_b1, (hidden,), dtype=jnp.float32) * 0.1
    w2 = jax.random.normal(k_w2, (hidden, d_model), dtype=jnp.float32) * 0.1
    b2 = jax.random.normal(k_b2, (d_model,), dtype=jnp.float32) * 0.1

    # Voxel coordinates (N, 3).
    voxel_coords = jax.random.uniform(
        k_coords, (n_voxels, 3), dtype=jnp.float32, minval=0.0, maxval=40.0)

    ref = _reference(voxel_coords, w1, b1, w2, b2)

    # Pre-pack weights once (hoisted out of the per-call path).
    packed = pack_mlp_params(w1, b1, w2, b2, _choose_pack(d_model))

    # Strict check in f32 (matches PyTorch reference semantics).
    out_f32 = dynamic_learnable_positional_encoding(
        voxel_coords, w1, b1, w2, b2, out_dtype=jnp.float32, packed_params=packed)
    out_f32 = jax.block_until_ready(out_f32)
    assert out_f32.shape == (n_voxels, d_model)
    assert jnp.allclose(out_f32, ref, atol=1e-4, rtol=1e-4), "f32 mismatch vs reference"

    # Default bf16 output path (halves dominant HBM writeback); loose tolerance.
    out_bf16 = dynamic_learnable_positional_encoding(
        voxel_coords, w1, b1, w2, b2, packed_params=packed)
    out_bf16 = jax.block_until_ready(out_bf16)
    assert out_bf16.shape == (n_voxels, d_model)
    assert jnp.allclose(out_bf16.astype(jnp.float32), ref, atol=0.25, rtol=0.05), \
        "bf16 mismatch vs reference"

    print("KERNEL_OK")
</pallas_src>

<mosaic_0001>
module attributes {stable_mosaic.version = 11 : i64} {
  func.func @_mlp_pe_kernel(%arg0: i32, %arg1: memref<128x12xf32, #tpu.memory_space<vmem>>, %arg2: memref<12x64xf32, #tpu.memory_space<vmem>>, %arg3: memref<1x64xf32, #tpu.memory_space<vmem>>, %arg4: memref<64x128xf32, #tpu.memory_space<vmem>>, %arg5: memref<1x128xf32, #tpu.memory_space<vmem>>, %arg6: memref<128x128xf32, #tpu.memory_space<vmem>>) attributes {dimension_semantics = [#tpu.dimension_semantics<parallel>], iteration_bounds = array<i64: 2>, scalar_prefetch = 0 : i64, scratch_operands = 0 : i64, tpu.core_type = #tpu.core_type<tc>, window_params = [{transform_indices = @transform_0, window_bounds = array<i64: 128, 12>}, {pipeline_mode = #tpu.pipeline_mode<synchronous>, transform_indices = @transform_1, window_bounds = array<i64: 12, 64>}, {pipeline_mode = #tpu.pipeline_mode<synchronous>, transform_indices = @transform_2, window_bounds = array<i64: 1, 64>}, {pipeline_mode = #tpu.pipeline_mode<synchronous>, transform_indices = @transform_3, window_bounds = array<i64: 64, 128>}, {pipeline_mode = #tpu.pipeline_mode<synchronous>, transform_indices = @transform_4, window_bounds = array<i64: 1, 128>}, {transform_indices = @transform_5, window_bounds = array<i64: 128, 128>}]} {
    %c0 = arith.constant 0 : index
    %c0_0 = arith.constant 0 : index
    %0 = vector.load %arg1[%c0, %c0_0] : memref<128x12xf32, #tpu.memory_space<vmem>>, vector<128x12xf32>
    %c0_1 = arith.constant 0 : index
    %c0_2 = arith.constant 0 : index
    %1 = vector.load %arg2[%c0_1, %c0_2] : memref<12x64xf32, #tpu.memory_space<vmem>>, vector<12x64xf32>
    %cst = arith.constant dense<0.000000e+00> : vector<128x64xf32>
    %2 = tpu.matmul %0, %1, %cst {dimension_numbers = #tpu.dot_dimension_numbers<[1], [0], [0], [1], [0, 0, 1, 1], [], []>} : vector<128x12xf32>, vector<12x64xf32>, vector<128x64xf32> -> vector<128x64xf32>
    %c0_3 = arith.constant 0 : index
    %c0_4 = arith.constant 0 : index
    %3 = vector.load %arg3[%c0_3, %c0_4] : memref<1x64xf32, #tpu.memory_space<vmem>>, vector<1x64xf32>
    %4 = vector.broadcast %3 : vector<1x64xf32> to vector<128x64xf32>
    %5 = arith.addf %2, %4 : vector<128x64xf32>
    %cst_5 = arith.constant 0.000000e+00 : f32
    %6 = vector.broadcast %cst_5 : f32 to vector<128x64xf32>
    %7 = arith.maximumf %5, %6 : vector<128x64xf32>
    %c0_6 = arith.constant 0 : index
    %c0_7 = arith.constant 0 : index
    %8 = vector.load %arg4[%c0_6, %c0_7] : memref<64x128xf32, #tpu.memory_space<vmem>>, vector<64x128xf32>
    %cst_8 = arith.constant dense<0.000000e+00> : vector<128x128xf32>
    %9 = tpu.matmul %7, %8, %cst_8 {dimension_numbers = #tpu.dot_dimension_numbers<[1], [0], [0], [1], [0, 0, 1, 1], [], []>} : vector<128x64xf32>, vector<64x128xf32>, vector<128x128xf32> -> vector<128x128xf32>
    %c0_9 = arith.constant 0 : index
    %c0_10 = arith.constant 0 : index
    %10 = vector.load %arg5[%c0_9, %c0_10] : memref<1x128xf32, #tpu.memory_space<vmem>>, vector<1x128xf32>
    %11 = vector.broadcast %10 : vector<1x128xf32> to vector<128x128xf32>
    %12 = arith.addf %9, %11 : vector<128x128xf32>
    %c0_11 = arith.constant 0 : index
    %c0_12 = arith.constant 0 : index
    %13 = vector.load %arg6[%c0_11, %c0_12] : memref<128x128xf32, #tpu.memory_space<vmem>>, vector<128x128xf32>
    tpu.vector_store %arg6[%c0_11, %c0_12], %12 {strides = array<i32>} : memref<128x128xf32, #tpu.memory_space<vmem>>, vector<128x128xf32>,
    return
  }
  func.func @transform_0(%arg0: i32) -> (i32, i32) {
    %c0_i32 = arith.constant 0 : i32
    %c0_i32_0 = arith.constant 0 : i32
    return %arg0, %c0_i32 : i32, i32
  }
  func.func @transform_1(%arg0: i32) -> (i32, i32) {
    %c0_i32 = arith.constant 0 : i32
    %c0_i32_0 = arith.constant 0 : i32
    %c0_i32_1 = arith.constant 0 : i32
    return %c0_i32, %c0_i32_0 : i32, i32
  }
  func.func @transform_2(%arg0: i32) -> (i32, i32) {
    %c0_i32 = arith.constant 0 : i32
    %c0_i32_0 = arith.constant 0 : i32
    %c0_i32_1 = arith.constant 0 : i32
    return %c0_i32, %c0_i32_0 : i32, i32
  }
  func.func @transform_3(%arg0: i32) -> (i32, i32) {
    %c0_i32 = arith.constant 0 : i32
    %c0_i32_0 = arith.constant 0 : i32
    %c0_i32_1 = arith.constant 0 : i32
    return %c0_i32, %c0_i32_0 : i32, i32
  }
  func.func @transform_4(%arg0: i32) -> (i32, i32) {
    %c0_i32 = arith.constant 0 : i32
    %c0_i32_0 = arith.constant 0 : i32
    %c0_i32_1 = arith.constant 0 : i32
    return %c0_i32, %c0_i32_0 : i32, i32
  }
  func.func @transform_5(%arg0: i32) -> (i32, i32) {
    %c0_i32 = arith.constant 0 : i32
    %c0_i32_0 = arith.constant 0 : i32
    return %arg0, %c0_i32 : i32, i32
  }
}

</mosaic_0001>

<llo_original>
// kernel: tpu_custom_call.1
$region0: #{tpu_custom_call.1}
  #allocation0 [shape = 'u32[]', space=smem, size = 0x4, offset = 0x4, fixed_abs, tag = 'smem constant byte address 0x4 - core index']
  #allocation1 [shape = 'u32[144,128]{1,0:T(1,128)}', space=vmem, size = 0x12000, scoped, tag = 'internal scratch']
  %s0 = inlined_call_operand.vmem [shape: f32[256,12], index: 0, kind: input, shape index: {}]
  %s1 = inlined_call_operand.vmem [shape: f32[12,64], index: 1, kind: input, shape index: {}]
  %s2 = inlined_call_operand.vmem [shape: f32[1,64], index: 2, kind: input, shape index: {}]
  %s3 = inlined_call_operand.vmem [shape: f32[64,128], index: 3, kind: input, shape index: {}]
  %s4 = inlined_call_operand.vmem [shape: f32[1,128], index: 4, kind: input, shape index: {}]
  %s5 = inlined_call_operand.hbm [shape: f32[256,128], index: 5, kind: output, shape index: {}]
  %s6 = sld [smem:[#allocation0]]
  $region53: #{tpu_custom_call.1} parent=0
    _
  %s8 = ssub.s32 1, %s6
  %s9 = scalar_select 0, %s8, %s6
  $region1: #{tpu_custom_call.1} parent=0
    #allocation2 [shape = 'u8[131072]{0}', space=vmem, size = 0x20000, scoped, tag = 'output window, operand 0']
    #allocation3 [shape = 's32[2]{0}', space=sflag, size = 0x8, scoped, tag = 'scoped memory for tpu_custom_call.1']
    %10 = vsyncpa [#allocation3], 0
    %s11 = scalar_lea.sflag [#allocation3], 1
    %12 = vsyncpa %s11, 0
    loop: start=0, step=1, limit=4
    $region2: #{tpu_custom_call.1} parent=1 // loop_pre_header
      _
    $region3: #{tpu_custom_call.1} parent=1 // loop_header
      %s14 = sphi 0, %s18
      %p15 = scmp.ge.s32.totalorder %s14, 4
      %s24 = sphi 0, %s26
      %s27 = sphi 0, %s24
      %s28 = sphi 0, %s27
      %s44 = sphi 0, %s28
      %s48 = sphi 0, %s48
      %s50 = sphi 0, %s48
      %s51 = sphi 0, %s50
      %s65 = sphi 0, %s51
      %s69 = sphi 0, %s69
      %s71 = sphi 0, %s69
      %s72 = sphi 0, %s71
      %s86 = sphi 0, %s72
      %s90 = sphi 0, %s90
      %s92 = sphi 0, %s90
      %s93 = sphi 0, %s92
      %s107 = sphi 0, %s93
      %s111 = sphi 0, %s111
      %s113 = sphi 0, %s111
      %s114 = sphi 0, %s113
      %s128 = sphi 0, %s114
      %s134 = sphi 0, %s136
      %s137 = sphi 0, %s134
      %s138 = sphi 0, %s137
      %s154 = sphi 0, %s138
    $region4: #{tpu_custom_call.1} parent=1 // loop_header_branch
      %17 = sbr.rel (%p15) target = $region8
    $region5: #{tpu_custom_call.1} parent=1 // loop_body
      %s19 = ssub.s32 %s14, 1
      %s20 = ssub.s32 %s14, 2
      %s21 = sadd.s32 %s14, 1
      %s22 = ssub.s32 %s14, %s21
      %p23 = scmp.eq.s32.totalorder %s22, 0
      %s25 = sadd.s32 %s24, 1
      %s26 = scalar_select %p23, %s24, %s25
      %p29 = pneg %p23
      %p30 = scmp.eq.s32.totalorder %s14, 1
      %p31 = por %p29, %p30
      %p32 = scmp.ne.s32.totalorder %s24, %s27
      %p33 = scmp.eq.s32.totalorder %s14, 0
      %p34 = por %p32, %p33
      %p35 = scmp.ne.s32.totalorder %s24, %s27
      %p36 = scmp.eq.s32.totalorder %s19, 1
      %p37 = por %p35, %p36
      %p38 = scmp.ne.s32.totalorder %s27, %s28
      %p39 = scmp.eq.s32.totalorder %s19, 0
      %p40 = por %p38, %p39
      %p41 = scmp.ne.s32.totalorder %s27, %s28
      %p42 = scmp.eq.s32.totalorder %s20, 1
      %p43 = por %p41, %p42
      %p45 = scmp.ne.s32.totalorder %s28, %s44
      %p46 = scmp.eq.s32.totalorder %s20, 0
      %p47 = por %p45, %p46
      %s49 = sadd.s32 %s48, 1
      %p52 = scmp.eq.s32.totalorder %s14, 1
      %p53 = scmp.ne.s32.totalorder %s48, %s50
      %p54 = scmp.eq.s32.totalorder %s14, 0
      %p55 = por %p53, %p54
      %p56 = scmp.ne.s32.totalorder %s48, %s50
      %p57 = scmp.eq.s32.totalorder %s19, 1
      %p58 = por %p56, %p57
      %p59 = scmp.ne.s32.totalorder %s50, %s51
      %p60 = scmp.eq.s32.totalorder %s19, 0
      %p61 = por %p59, %p60
      %p62 = scmp.ne.s32.totalorder %s50, %s51
      %p63 = scmp.eq.s32.totalorder %s20, 1
      %p64 = por %p62, %p63
      %p66 = scmp.ne.s32.totalorder %s51, %s65
      %p67 = scmp.eq.s32.totalorder %s20, 0
      %p68 = por %p66, %p67
      %s70 = sadd.s32 %s69, 1
      %p73 = scmp.eq.s32.totalorder %s14, 1
      %p74 = scmp.ne.s32.totalorder %s69, %s71
      %p75 = scmp.eq.s32.totalorder %s14, 0
      %p76 = por %p74, %p75
      %p77 = scmp.ne.s32.totalorder %s69, %s71
      %p78 = scmp.eq.s32.totalorder %s19, 1
      %p79 = por %p77, %p78
      %p80 = scmp.ne.s32.totalorder %s71, %s72
      %p81 = scmp.eq.s32.totalorder %s19, 0
      %p82 = por %p80, %p81
      %p83 = scmp.ne.s32.totalorder %s71, %s72
      %p84 = scmp.eq.s32.totalorder %s20, 1
      %p85 = por %p83, %p84
      %p87 = scmp.ne.s32.totalorder %s72, %s86
      %p88 = scmp.eq.s32.totalorder %s20, 0
      %p89 = por %p87, %p88
      %s91 = sadd.s32 %s90, 1
      %p94 = scmp.eq.s32.totalorder %s14, 1
      %p95 = scmp.ne.s32.totalorder %s90, %s92
      %p96 = scmp.eq.s32.totalorder %s14, 0
      %p97 = por %p95, %p96
      %p98 = scmp.ne.s32.totalorder %s90, %s92
      %p99 = scmp.eq.s32.totalorder %s19, 1
      %p100 = por %p98, %p99
      %p101 = scmp.ne.s32.totalorder %s92, %s93
      %p102 = scmp.eq.s32.totalorder %s19, 0
      %p103 = por %p101, %p102
      %p104 = scmp.ne.s32.totalorder %s92, %s93
      %p105 = scmp.eq.s32.totalorder %s20, 1
      %p106 = por %p104, %p105
      %p108 = scmp.ne.s32.totalorder %s93, %s107
      %p109 = scmp.eq.s32.totalorder %s20, 0
      %p110 = por %p108, %p109
      %s112 = sadd.s32 %s111, 1
      %p115 = scmp.eq.s32.totalorder %s14, 1
      %p116 = scmp.ne.s32.totalorder %s111, %s113
      %p117 = scmp.eq.s32.totalorder %s14, 0
      %p118 = por %p116, %p117
      %p119 = scmp.ne.s32.totalorder %s111, %s113
      %p120 = scmp.eq.s32.totalorder %s19, 1
      %p121 = por %p119, %p120
      %p122 = scmp.ne.s32.totalorder %s113, %s114
      %p123 = scmp.eq.s32.totalorder %s19, 0
      %p124 = por %p122, %p123
      %p125 = scmp.ne.s32.totalorder %s113, %s114
      %p126 = scmp.eq.s32.totalorder %s20, 1
      %p127 = por %p125, %p126
      %p129 = scmp.ne.s32.totalorder %s114, %s128
      %p130 = scmp.eq.s32.totalorder %s20, 0
      %p131 = por %p129, %p130
      %s132 = ssub.s32 %s14, %s21
      %p133 = scmp.eq.s32.totalorder %s132, 0
      %s135 = sadd.s32 %s134, 1
      %s136 = scalar_select %p133, %s134, %s135
      %p139 = pneg %p133
      %p140 = scmp.eq.s32.totalorder %s14, 1
      %p141 = por %p139, %p140
      %p142 = scmp.ne.s32.totalorder %s134, %s137
      %p143 = scmp.eq.s32.totalorder %s14, 0
      %p144 = por %p142, %p143
      %p145 = scmp.ne.s32.totalorder %s134, %s137
      %p146 = scmp.eq.s32.totalorder %s19, 1
      %p147 = por %p145, %p146
      %p148 = scmp.ne.s32.totalorder %s137, %s138
      %p149 = scmp.eq.s32.totalorder %s19, 0
      %p150 = por %p148, %p149
      %p151 = scmp.ne.s32.totalorder %s137, %s138
      %p152 = scmp.eq.s32.totalorder %s20, 1
      %p153 = por %p151, %p152
      %p155 = scmp.ne.s32.totalorder %s138, %s154
      %p156 = scmp.eq.s32.totalorder %s20, 0
      %p157 = por %p155, %p156
      %p158 = scmp.le.s32.totalorder 1, %s14
      %p159 = scmp.lt.s32.totalorder %s14, 3
      %p160 = pnand %p158, %p159
      %p161 = pneg %p160
      // Predicated region
      $region9: #{tpu_custom_call.1} parent=5 // pred_check
        _
      $region10: #{tpu_custom_call.1} parent=5 // pred_check_branch
        %163 = sbr.rel (%p160) target = $region12
      $region11: #{tpu_custom_call.1} parent=5 // pred_region
        %s164 = ssub.s32 %s14, 1
        // Predicated region
        $region13: #{tpu_custom_call.1} parent=11 // pred_check
          %p165 = pneg %p61
        $region14: #{tpu_custom_call.1} parent=11 // pred_check_branch
          %167 = sbr.rel (%p165) target = $region16
        $region15: #{tpu_custom_call.1} parent=11 // pred_region
          _
        $region16: #{tpu_custom_call.1} parent=11 // pred_fallthru
          _
        // Predicated region
        $region17: #{tpu_custom_call.1} parent=11 // pred_check
          %p168 = pneg %p82
        $region18: #{tpu_custom_call.1} parent=11 // pred_check_branch
          %170 = sbr.rel (%p168) target = $region20
        $region19: #{tpu_custom_call.1} parent=11 // pred_region
          _
        $region20: #{tpu_custom_call.1} parent=11 // pred_fallthru
          _
        // Predicated region
        $region21: #{tpu_custom_call.1} parent=11 // pred_check
          %p171 = pneg %p103
        $region22: #{tpu_custom_call.1} parent=11 // pred_check_branch
          %173 = sbr.rel (%p171) target = $region24
        $region23: #{tpu_custom_call.1} parent=11 // pred_region
          _
        $region24: #{tpu_custom_call.1} parent=11 // pred_fallthru
          _
        // Predicated region
        $region25: #{tpu_custom_call.1} parent=11 // pred_check
          %p174 = pneg %p124
        $region26: #{tpu_custom_call.1} parent=11 // pred_check_branch
          %176 = sbr.rel (%p174) target = $region28
        $region27: #{tpu_custom_call.1} parent=11 // pred_region
          _
        $region28: #{tpu_custom_call.1} parent=11 // pred_fallthru
          _
      $region12: #{tpu_custom_call.1} parent=5 // pred_fallthru
        _
      %p177 = scmp.lt.s32.totalorder %s14, 2
      // Predicated region
      $region29: #{tpu_custom_call.1} parent=5 // pred_check
        %p178 = pneg %p177
      $region30: #{tpu_custom_call.1} parent=5 // pred_check_branch
        %180 = sbr.rel (%p178) target = $region32
      $region31: #{tpu_custom_call.1} parent=5 // pred_region
        // Predicated region
        $region33: #{tpu_custom_call.1} parent=31 // pred_check
          %p181 = pneg %p34
        $region34: #{tpu_custom_call.1} parent=31 // pred_check_branch
          %183 = sbr.rel (%p181) target = $region36
        $region35: #{tpu_custom_call.1} parent=31 // pred_region
          %s184 = smul.u32 16, %s14
          %p185 = scmp.lt.s32.totalorder %s184, 31
          %s186 = scalar_select %p185, %s184, 31
          %s187 = smul.addr %s186, 8
          %s188 = scalar_lea.vmem %s0, %s187
          %s189 = smul.u32 16, %s14
        $region36: #{tpu_custom_call.1} parent=31 // pred_fallthru
          _
      $region32: #{tpu_custom_call.1} parent=5 // pred_fallthru
        _
      %p190 = scmp.le.s32.totalorder 1, %s14
      %p191 = scmp.lt.s32.totalorder %s14, 3
      %p192 = pnand %p190, %p191
      %p193 = pneg %p192
      // Predicated region
      $region37: #{tpu_custom_call.1} parent=5 // pred_check
        _
      $region38: #{tpu_custom_call.1} parent=5 // pred_check_branch
        %195 = sbr.rel (%p192) target = $region40
      $region39: #{tpu_custom_call.1} parent=5 // pred_region
        %s196 = ssub.s32 %s14, 1
        %s197 = smul.u32 16, %s19
        %p198 = scmp.lt.s32.totalorder %s197, 31
        %s199 = scalar_select %p198, %s197, 31
        %s200 = smul.addr %s199, 8
        %s201 = scalar_lea.vmem %s0, %s200
        %p202 = pneg %p40
        %p203 = pneg %p37
        %p204 = pneg %p61
        %p205 = pneg %p58
        %p206 = pneg %p82
        %p207 = pneg %p79
        %p208 = pneg %p103
        %p209 = pneg %p100
        %p210 = pneg %p124
        %p211 = pneg %p121
        %p212 = pneg %p150
        %p213 = pneg %p147
        %s214 = sand.u32 %s137, 1
        %s215 = scalar_lea.sflag [#allocation3], %s214
        %s216 = sand.u32 %s137, 1
        %s217 = smul.addr %s216, 128
        %s218 = scalar_lea.vmem [#allocation2], %s217
        %s219 = smul.u32 16, %s19
        %p220 = scmp.lt.s32.totalorder %s219, 31
        %s221 = scalar_select %p220, %s219, 31
        %s222 = smul.addr %s221, 8
        %s223 = scalar_lea.vmem %s0, %s222
        %s224 = smul.u32 16, %s19
        %s225 = smul.u32 16, %s19
        %v226 = vld [vmem:[%s223] sm:$0xff]
        %v227 = vld [vmem:[%s223 + $0x8] sm:$0xff]
        %v228 = vld [vmem:[%s223 + $0x10] sm:$0xff]
        %v229 = vld [vmem:[%s223 + $0x18] sm:$0xff]
        %v230 = vld [vmem:[%s223 + $0x20] sm:$0xff]
        %v231 = vld [vmem:[%s223 + $0x28] sm:$0xff]
        %v232 = vld [vmem:[%s223 + $0x30] sm:$0xff]
        %v233 = vld [vmem:[%s223 + $0x38] sm:$0xff]
        %v234 = vld [vmem:[%s223 + $0x40] sm:$0xff]
        %v235 = vld [vmem:[%s223 + $0x48] sm:$0xff]
        %v236 = vld [vmem:[%s223 + $0x50] sm:$0xff]
        %v237 = vld [vmem:[%s223 + $0x58] sm:$0xff]
        %v238 = vld [vmem:[%s223 + $0x60] sm:$0xff]
        %v239 = vld [vmem:[%s223 + $0x68] sm:$0xff]
        %v240 = vld [vmem:[%s223 + $0x70] sm:$0xff]
        %v241 = vld [vmem:[%s223 + $0x78] sm:$0xff]
        %v242 = vld [vmem:[%s1] sm:$0xff]
        %v243 = vld [vmem:[%s1 + $0x8] sm:$0xf]
        %v244 = vld [vmem:[%s2] sm:$0x1]
        %v246 = vlaneseq
        %v247 = vshrl.u32 %v246, 7
        %v248 = vsub.s32 0, %v247
        %v249 = vrot.slane %v244, %v248
        %vm251 = vcmask 97280
        %v253 = vsel %vm251, %v226, 0
        %v256 = vsel %vm251, %v227, 0
        %v259 = vsel %vm251, %v228, 0
        %v262 = vsel %vm251, %v229, 0
        %v265 = vsel %vm251, %v230, 0
        %v268 = vsel %vm251, %v231, 0
        %v271 = vsel %vm251, %v232, 0
        %v274 = vsel %vm251, %v233, 0
        %v277 = vsel %vm251, %v234, 0
        %v280 = vsel %vm251, %v235, 0
        %v283 = vsel %vm251, %v236, 0
        %v286 = vsel %vm251, %v237, 0
        %v289 = vsel %vm251, %v238, 0
        %v292 = vsel %vm251, %v239, 0
        %v295 = vsel %vm251, %v240, 0
        %v298 = vsel %vm251, %v241, 0
        %vm300 = vcmask 1043456
        %v302 = vsel %vm300, %v243, 0
        %304 = vmatprep.subr.mxu0 0.0
        %305 = vmatpush1.msra.mxu0 0.0
        %306 = vmatprep.subr.mxu0 0.0
        %307 = vmatpush1.msra.mxu0 0.0
        %308 = vmatprep.subr.mxu0 0.0
        %309 = vmatpush1.msra.mxu0 0.0
        %310 = vmatprep.subr.mxu0 0.0
        %311 = vmatpush1.msra.mxu0 0.0
        %312 = vmatprep.subr.mxu0 0.0
        %313 = vmatpush1.msra.mxu0 0.0
        %314 = vmatprep.subr.mxu0 0.0
        %315 = vmatpush1.msra.mxu0 0.0
        %316 = vmatprep.subr.mxu0 0.0
        %317 = vmatpush1.msra.mxu0 0.0
        %318 = vmatprep.subr.mxu0 0.0
        %319 = vmatpush1.msra.mxu0 0.0
        %320 = vmatprep.subr.mxu0 0.0
        %321 = vmatpush1.msra.mxu0 0.0
        %322 = vmatprep.subr.mxu0 0.0
        %323 = vmatpush1.msra.mxu0 0.0
        %324 = vmatprep.subr.mxu0 0.0
        %325 = vmatpush1.msra.mxu0 0.0
        %326 = vmatprep.subr.mxu0 0.0
        %327 = vmatpush1.msra.mxu0 0.0
        %328 = vmatprep.subr.mxu0 0.0
        %329 = vmatpush1.msra.mxu0 0.0
        %330 = vmatprep.subr.mxu0 0.0
        %331 = vmatpush1.msra.mxu0 0.0
        %332 = vmatprep.subr.mxu0 0.0
        %333 = vmatpush1.msra.mxu0 %v302
        %334 = vmatprep.subr.mxu0 0.0
        %335 = vmatpush1.msra.mxu0 %v242
        %336 = vmatprep.subr.mxu0 0.0
        %337 = vmatpush2.msra.mxu0 0.0
        %338 = vmatprep.subr.mxu0 0.0
        %339 = vmatpush2.msra.mxu0 0.0
        %340 = vmatprep.subr.mxu0 0.0
        %341 = vmatpush2.msra.mxu0 0.0
        %342 = vmatprep.subr.mxu0 0.0
        %343 = vmatpush2.msra.mxu0 0.0
        %344 = vmatprep.subr.mxu0 0.0
        %345 = vmatpush2.msra.mxu0 0.0
        %346 = vmatprep.subr.mxu0 0.0
        %347 = vmatpush2.msra.mxu0 0.0
        %348 = vmatprep.subr.mxu0 0.0
        %349 = vmatpush2.msra.mxu0 0.0
        %350 = vmatprep.subr.mxu0 0.0
        %351 = vmatpush2.msra.mxu0 0.0
        %352 = vmatprep.subr.mxu0 0.0
        %353 = vmatpush2.msra.mxu0 0.0
        %354 = vmatprep.subr.mxu0 0.0
        %355 = vmatpush2.msra.mxu0 0.0
        %356 = vmatprep.subr.mxu0 0.0
        %357 = vmatpush2.msra.mxu0 0.0
        %358 = vmatprep.subr.mxu0 0.0
        %359 = vmatpush2.msra.mxu0 0.0
        %360 = vmatprep.subr.mxu0 0.0
        %361 = vmatpush2.msra.mxu0 0.0
        %362 = vmatprep.subr.mxu0 0.0
        %363 = vmatpush2.msra.mxu0 0.0
        %364 = vmatprep.subr.mxu0 0.0
        %365 = vmatpush2.msra.mxu0 0.0
        %366 = vmatprep.subr.mxu0 0.0
        %367 = vmatpush2.msra.mxu0 0.0
        %368 = vmatprep.mubr.f32.mxu0 0.0
        %369 = vmatmul.mubr.f32.gmra.mxu0 %v253
        %v370 = vpop.f32.mrf.mxu0
        %v371 = vadd.f32 %v249, %v370
        %v372 = vpop.f32.mrf.mxu0
        %373 = vmatprep.mubr.f32.mxu0 0.0
        %374 = vmatmul.mubr.f32.gmra.mxu0 %v256
        %v375 = vpop.f32.mrf.mxu0
        %v376 = vadd.f32 %v249, %v375
        %v377 = vpop.f32.mrf.mxu0
        %378 = vmatprep.mubr.f32.mxu0 0.0
        %379 = vmatmul.mubr.f32.gmra.mxu0 %v259
        %v380 = vpop.f32.mrf.mxu0
        %v381 = vadd.f32 %v249, %v380
        %v382 = vpop.f32.mrf.mxu0
        %383 = vmatprep.mubr.f32.mxu0 0.0
        %384 = vmatmul.mubr.f32.gmra.mxu0 %v262
        %v385 = vpop.f32.mrf.mxu0
        %v386 = vadd.f32 %v249, %v385
        %v387 = vpop.f32.mrf.mxu0
        %388 = vmatprep.mubr.f32.mxu0 0.0
        %389 = vmatmul.mubr.f32.gmra.mxu0 %v265
        %v390 = vpop.f32.mrf.mxu0
        %v391 = vadd.f32 %v249, %v390
        %v392 = vpop.f32.mrf.mxu0
        %393 = vmatprep.mubr.f32.mxu0 0.0
        %394 = vmatmul.mubr.f32.gmra.mxu0 %v268
        %v395 = vpop.f32.mrf.mxu0
        %v396 = vadd.f32 %v249, %v395
        %v397 = vpop.f32.mrf.mxu0
        %398 = vmatprep.mubr.f32.mxu0 0.0
        %399 = vmatmul.mubr.f32.gmra.mxu0 %v271
        %v400 = vpop.f32.mrf.mxu0
        %v401 = vadd.f32 %v249, %v400
        %v402 = vpop.f32.mrf.mxu0
        %403 = vmatprep.mubr.f32.mxu0 0.0
        %404 = vmatmul.mubr.f32.gmra.mxu0 %v274
        %v405 = vpop.f32.mrf.mxu0
        %v406 = vadd.f32 %v249, %v405
        %v407 = vpop.f32.mrf.mxu0
        %408 = vmatprep.mubr.f32.mxu0 0.0
        %409 = vmatmul.mubr.f32.gmra.mxu0 %v277
        %v410 = vpop.f32.mrf.mxu0
        %v411 = vadd.f32 %v249, %v410
        %v412 = vpop.f32.mrf.mxu0
        %413 = vmatprep.mubr.f32.mxu0 0.0
        %414 = vmatmul.mubr.f32.gmra.mxu0 %v280
        %v415 = vpop.f32.mrf.mxu0
        %v416 = vadd.f32 %v249, %v415
        %v417 = vpop.f32.mrf.mxu0
        %418 = vmatprep.mubr.f32.mxu0 0.0
        %419 = vmatmul.mubr.f32.gmra.mxu0 %v283
        %v420 = vpop.f32.mrf.mxu0
        %v421 = vadd.f32 %v249, %v420
        %v422 = vpop.f32.mrf.mxu0
        %423 = vmatprep.mubr.f32.mxu0 0.0
        %424 = vmatmul.mubr.f32.gmra.mxu0 %v286
        %v425 = vpop.f32.mrf.mxu0
        %v426 = vadd.f32 %v249, %v425
        %v427 = vpop.f32.mrf.mxu0
        %428 = vmatprep.mubr.f32.mxu0 0.0
        %429 = vmatmul.mubr.f32.gmra.mxu0 %v289
        %v430 = vpop.f32.mrf.mxu0
        %v431 = vadd.f32 %v249, %v430
        %v432 = vpop.f32.mrf.mxu0
        %433 = vmatprep.mubr.f32.mxu0 0.0
        %434 = vmatmul.mubr.f32.gmra.mxu0 %v292
        %v435 = vpop.f32.mrf.mxu0
        %v436 = vadd.f32 %v249, %v435
        %v437 = vpop.f32.mrf.mxu0
        %438 = vmatprep.mubr.f32.mxu0 0.0
        %439 = vmatmul.mubr.f32.gmra.mxu0 %v295
        %v440 = vpop.f32.mrf.mxu0
        %v441 = vadd.f32 %v249, %v440
        %v442 = vpop.f32.mrf.mxu0
        %443 = vmatprep.mubr.f32.mxu0 0.0
        %444 = vmatmul.mubr.f32.gmra.mxu0 %v298
        %v445 = vpop.f32.mrf.mxu0
        %v446 = vadd.f32 %v249, %v445
        %v447 = vpop.f32.mrf.mxu0
        %448 = vdwg.mxu0
        %v449 = vmax.f32 %v371, 0.0
        %v450 = vmax.f32 %v376, 0.0
        %v451 = vmax.f32 %v381, 0.0
        %v452 = vmax.f32 %v386, 0.0
        %v453 = vmax.f32 %v391, 0.0
        %v454 = vmax.f32 %v396, 0.0
        %v455 = vmax.f32 %v401, 0.0
        %v456 = vmax.f32 %v406, 0.0
        %v457 = vmax.f32 %v411, 0.0
        %v458 = vmax.f32 %v416, 0.0
        %v459 = vmax.f32 %v421, 0.0
        %v460 = vmax.f32 %v426, 0.0
        %v461 = vmax.f32 %v431, 0.0
        %v462 = vmax.f32 %v436, 0.0
        %v463 = vmax.f32 %v441, 0.0
        %v464 = vmax.f32 %v446, 0.0
        %v465 = vld [vmem:[%s3] sm:$0xff]
        %v466 = vld [vmem:[%s3 + $0x8] sm:$0xff]
        %v467 = vld [vmem:[%s3 + $0x10] sm:$0xff]
        %v468 = vld [vmem:[%s3 + $0x18] sm:$0xff]
        %v469 = vld [vmem:[%s3 + $0x20] sm:$0xff]
        %v470 = vld [vmem:[%s3 + $0x28] sm:$0xff]
        %v471 = vld [vmem:[%s3 + $0x30] sm:$0xff]
        %v472 = vld [vmem:[%s3 + $0x38] sm:$0xff]
        %v473 = vld [vmem:[%s4] sm:$0x1]
        %v475 = vlaneseq
        %v476 = vshrl.u32 %v475, 7
        %v477 = vsub.s32 0, %v476
        %v478 = vrot.slane %v473, %v477
        %vm480 = vcmask 523264
        %v482 = vsel %vm480, %v449, 0
        %v485 = vsel %vm480, %v450, 0
        %v488 = vsel %vm480, %v451, 0
        %v491 = vsel %vm480, %v452, 0
        %v494 = vsel %vm480, %v453, 0
        %v497 = vsel %vm480, %v454, 0
        %v500 = vsel %vm480, %v455, 0
        %v503 = vsel %vm480, %v456, 0
        %v506 = vsel %vm480, %v457, 0
        %v509 = vsel %vm480, %v458, 0
        %v512 = vsel %vm480, %v459, 0
        %v515 = vsel %vm480, %v460, 0
        %v518 = vsel %vm480, %v461, 0
        %v521 = vsel %vm480, %v462, 0
        %v524 = vsel %vm480, %v463, 0
        %v527 = vsel %vm480, %v464, 0
        %529 = vmatprep.subr.mxu0 0.0
        %530 = vmatpush1.msra.mxu0 0.0
        %531 = vmatprep.subr.mxu0 0.0
        %532 = vmatpush1.msra.mxu0 0.0
        %533 = vmatprep.subr.mxu0 0.0
        %534 = vmatpush1.msra.mxu0 0.0
        %535 = vmatprep.subr.mxu0 0.0
        %536 = vmatpush1.msra.mxu0 0.0
        %537 = vmatprep.subr.mxu0 0.0
        %538 = vmatpush1.msra.mxu0 0.0
        %539 = vmatprep.subr.mxu0 0.0
        %540 = vmatpush1.msra.mxu0 0.0
        %541 = vmatprep.subr.mxu0 0.0
        %542 = vmatpush1.msra.mxu0 0.0
        %543 = vmatprep.subr.mxu0 0.0
        %544 = vmatpush1.msra.mxu0 0.0
        %545 = vmatprep.subr.mxu0 0.0
        %546 = vmatpush1.msra.mxu0 %v472
        %547 = vmatprep.subr.mxu0 0.0
        %548 = vmatpush1.msra.mxu0 %v471
        %549 = vmatprep.subr.mxu0 0.0
        %550 = vmatpush1.msra.mxu0 %v470
        %551 = vmatprep.subr.mxu0 0.0
        %552 = vmatpush1.msra.mxu0 %v469
        %553 = vmatprep.subr.mxu0 0.0
        %554 = vmatpush1.msra.mxu0 %v468
        %555 = vmatprep.subr.mxu0 0.0
        %556 = vmatpush1.msra.mxu0 %v467
        %557 = vmatprep.subr.mxu0 0.0
        %558 = vmatpush1.msra.mxu0 %v466
        %559 = vmatprep.subr.mxu0 0.0
        %560 = vmatpush1.msra.mxu0 %v465
        %561 = vmatprep.subr.mxu0 0.0
        %562 = vmatpush2.msra.mxu0 0.0
        %563 = vmatprep.subr.mxu0 0.0
        %564 = vmatpush2.msra.mxu0 0.0
        %565 = vmatprep.subr.mxu0 0.0
        %566 = vmatpush2.msra.mxu0 0.0
        %567 = vmatprep.subr.mxu0 0.0
        %568 = vmatpush2.msra.mxu0 0.0
        %569 = vmatprep.subr.mxu0 0.0
        %570 = vmatpush2.msra.mxu0 0.0
        %571 = vmatprep.subr.mxu0 0.0
        %572 = vmatpush2.msra.mxu0 0.0
        %573 = vmatprep.subr.mxu0 0.0
        %574 = vmatpush2.msra.mxu0 0.0
        %575 = vmatprep.subr.mxu0 0.0
        %576 = vmatpush2.msra.mxu0 0.0
        %577 = vmatprep.subr.mxu0 0.0
        %578 = vmatpush2.msra.mxu0 0.0
        %579 = vmatprep.subr.mxu0 0.0
        %580 = vmatpush2.msra.mxu0 0.0
        %581 = vmatprep.subr.mxu0 0.0
        %582 = vmatpush2.msra.mxu0 0.0
        %583 = vmatprep.subr.mxu0 0.0
        %584 = vmatpush2.msra.mxu0 0.0
        %585 = vmatprep.subr.mxu0 0.0
        %586 = vmatpush2.msra.mxu0 0.0
        %587 = vmatprep.subr.mxu0 0.0
        %588 = vmatpush2.msra.mxu0 0.0
        %589 = vmatprep.subr.mxu0 0.0
        %590 = vmatpush2.msra.mxu0 0.0
        %591 = vmatprep.subr.mxu0 0.0
        %592 = vmatpush2.msra.mxu0 0.0
        %593 = vmatprep.mubr.f32.mxu0 0.0
        %594 = vmatmul.mubr.f32.gmra.mxu0 %v482
        %v595 = vpop.f32.mrf.mxu0
        %v596 = vadd.f32 %v478, %v595
        %v597 = vpop.f32.mrf.mxu0
        %598 = vmatprep.mubr.f32.mxu0 0.0
        %599 = vmatmul.mubr.f32.gmra.mxu0 %v485
        %v600 = vpop.f32.mrf.mxu0
        %v601 = vadd.f32 %v478, %v600
        %v602 = vpop.f32.mrf.mxu0
        %603 = vmatprep.mubr.f32.mxu0 0.0
        %604 = vmatmul.mubr.f32.gmra.mxu0 %v488
        %v605 = vpop.f32.mrf.mxu0
        %v606 = vadd.f32 %v478, %v605
        %v607 = vpop.f32.mrf.mxu0
        %608 = vmatprep.mubr.f32.mxu0 0.0
        %609 = vmatmul.mubr.f32.gmra.mxu0 %v491
        %v610 = vpop.f32.mrf.mxu0
        %v611 = vadd.f32 %v478, %v610
        %v612 = vpop.f32.mrf.mxu0
        %613 = vmatprep.mubr.f32.mxu0 0.0
        %614 = vmatmul.mubr.f32.gmra.mxu0 %v494
        %v615 = vpop.f32.mrf.mxu0
        %v616 = vadd.f32 %v478, %v615
        %v617 = vpop.f32.mrf.mxu0
        %618 = vmatprep.mubr.f32.mxu0 0.0
        %619 = vmatmul.mubr.f32.gmra.mxu0 %v497
        %v620 = vpop.f32.mrf.mxu0
        %v621 = vadd.f32 %v478, %v620
        %v622 = vpop.f32.mrf.mxu0
        %623 = vmatprep.mubr.f32.mxu0 0.0
        %624 = vmatmul.mubr.f32.gmra.mxu0 %v500
        %v625 = vpop.f32.mrf.mxu0
        %v626 = vadd.f32 %v478, %v625
        %v627 = vpop.f32.mrf.mxu0
        %628 = vmatprep.mubr.f32.mxu0 0.0
        %629 = vmatmul.mubr.f32.gmra.mxu0 %v503
        %v630 = vpop.f32.mrf.mxu0
        %v631 = vadd.f32 %v478, %v630
        %v632 = vpop.f32.mrf.mxu0
        %633 = vmatprep.mubr.f32.mxu0 0.0
        %634 = vmatmul.mubr.f32.gmra.mxu0 %v506
        %v635 = vpop.f32.mrf.mxu0
        %v636 = vadd.f32 %v478, %v635
        %v637 = vpop.f32.mrf.mxu0
        %638 = vmatprep.mubr.f32.mxu0 0.0
        %639 = vmatmul.mubr.f32.gmra.mxu0 %v509
        %v640 = vpop.f32.mrf.mxu0
        %v641 = vadd.f32 %v478, %v640
        %v642 = vpop.f32.mrf.mxu0
        %643 = vmatprep.mubr.f32.mxu0 0.0
        %644 = vmatmul.mubr.f32.gmra.mxu0 %v512
        %v645 = vpop.f32.mrf.mxu0
        %v646 = vadd.f32 %v478, %v645
        %v647 = vpop.f32.mrf.mxu0
        %648 = vmatprep.mubr.f32.mxu0 0.0
        %649 = vmatmul.mubr.f32.gmra.mxu0 %v515
        %v650 = vpop.f32.mrf.mxu0
        %v651 = vadd.f32 %v478, %v650
        %v652 = vpop.f32.mrf.mxu0
        %653 = vmatprep.mubr.f32.mxu0 0.0
        %654 = vmatmul.mubr.f32.gmra.mxu0 %v518
        %v655 = vpop.f32.mrf.mxu0
        %v656 = vadd.f32 %v478, %v655
        %v657 = vpop.f32.mrf.mxu0
        %658 = vmatprep.mubr.f32.mxu0 0.0
        %659 = vmatmul.mubr.f32.gmra.mxu0 %v521
        %v660 = vpop.f32.mrf.mxu0
        %v661 = vadd.f32 %v478, %v660
        %v662 = vpop.f32.mrf.mxu0
        %663 = vmatprep.mubr.f32.mxu0 0.0
        %664 = vmatmul.mubr.f32.gmra.mxu0 %v524
        %v665 = vpop.f32.mrf.mxu0
        %v666 = vadd.f32 %v478, %v665
        %v667 = vpop.f32.mrf.mxu0
        %668 = vmatprep.mubr.f32.mxu0 0.0
        %669 = vmatmul.mubr.f32.gmra.mxu0 %v527
        %v670 = vpop.f32.mrf.mxu0
        %v671 = vadd.f32 %v478, %v670
        %v672 = vpop.f32.mrf.mxu0
        %673 = vdwg.mxu0
        %674 = vst [vmem:[%s218] sm:$0xff] %v596
        %675 = vst [vmem:[%s218 + $0x8] sm:$0xff] %v601
        %676 = vst [vmem:[%s218 + $0x10] sm:$0xff] %v606
        %677 = vst [vmem:[%s218 + $0x18] sm:$0xff] %v611
        %678 = vst [vmem:[%s218 + $0x20] sm:$0xff] %v616
        %679 = vst [vmem:[%s218 + $0x28] sm:$0xff] %v621
        %680 = vst [vmem:[%s218 + $0x30] sm:$0xff] %v626
        %681 = vst [vmem:[%s218 + $0x38] sm:$0xff] %v631
        %682 = vst [vmem:[%s218 + $0x40] sm:$0xff] %v636
        %683 = vst [vmem:[%s218 + $0x48] sm:$0xff] %v641
        %684 = vst [vmem:[%s218 + $0x50] sm:$0xff] %v646
        %685 = vst [vmem:[%s218 + $0x58] sm:$0xff] %v651
        %686 = vst [vmem:[%s218 + $0x60] sm:$0xff] %v656
        %687 = vst [vmem:[%s218 + $0x68] sm:$0xff] %v661
        %688 = vst [vmem:[%s218 + $0x70] sm:$0xff] %v666
        %689 = vst [vmem:[%s218 + $0x78] sm:$0xff] %v671
        %s690 = sand.u32 %s137, 1
        %s691 = scalar_lea.sflag [#allocation3], %s690
        %s692 = sand.u32 %s137, 1
        %s693 = smul.addr %s692, 128
        %s694 = scalar_lea.vmem [#allocation2], %s693
        // Predicated region
        $region41: #{tpu_custom_call.1} parent=39 // pred_check
          %p695 = pneg %p147
        $region42: #{tpu_custom_call.1} parent=39 // pred_check_branch
          %697 = sbr.rel (%p695) target = $region44
        $region43: #{tpu_custom_call.1} parent=39 // pred_region
          %s698 = smul.u32 16, %s19
          %s700 = ssub.s32 2048, 2048
          %701 = vsyncadd %s691, %s700
          %s702 = smul.addr %s698, 128
          %s703 = scalar_lea.hbm %s5, %s702
          %s704 = sshll.u32 %s694, 4
          %s705 = int_to_ptr.vmem [resolvable:$true] %s704
          %710 = dma.vmem_to_hbm [thread:$0]  %s705, 2048, %s703, %s691, 128, 128, 8
        $region44: #{tpu_custom_call.1} parent=39 // pred_fallthru
          _
      $region40: #{tpu_custom_call.1} parent=5 // pred_fallthru
        _
      %p711 = scmp.le.s32.totalorder 2, %s14
      // Predicated region
      $region45: #{tpu_custom_call.1} parent=5 // pred_check
        %p712 = pneg %p711
      $region46: #{tpu_custom_call.1} parent=5 // pred_check_branch
        %714 = sbr.rel (%p712) target = $region48
      $region47: #{tpu_custom_call.1} parent=5 // pred_region
        %s715 = ssub.s32 %s14, 2
        // Predicated region
        $region49: #{tpu_custom_call.1} parent=47 // pred_check
          %p716 = pneg %p153
        $region50: #{tpu_custom_call.1} parent=47 // pred_check_branch
          %718 = sbr.rel (%p716) target = $region52
        $region51: #{tpu_custom_call.1} parent=47 // pred_region
          %s719 = sand.u32 %s138, 1
          %s720 = scalar_lea.sflag [#allocation3], %s719
          %s721 = sand.u32 %s138, 1
          %s722 = smul.addr %s721, 128
          %s723 = scalar_lea.vmem [#allocation2], %s722
          %724 = dma.done %s720, 2048
        $region52: #{tpu_custom_call.1} parent=47 // pred_fallthru
          _
      $region48: #{tpu_custom_call.1} parent=5 // pred_fallthru
        _
    $region6: #{tpu_custom_call.1} parent=1 // loop_footer
      %s18 = sadd.s32 1, %s14
    $region7: #{tpu_custom_call.1} parent=1 // loop_footer_branch
      %13 = sbr.rel target = $region3
    $region8: #{tpu_custom_call.1} parent=1 // loop_exit
      _
    %725 = vsyncpa [#allocation3], 1
    %s726 = scalar_lea.sflag [#allocation3], 1
    %727 = vsyncpa %s726, 1

</llo_original>
